<compile_context>
chip_gen: v7x
topology: tpu7x:2x2x1
jax: 0.10.0
libtpu: 0.0.40
codegen_flags: <defaults>
</compile_context>

<pallas_src>
import jax
import jax.numpy as jnp
import numpy as np
from jax.experimental import pallas as pl
from jax.experimental.pallas import tpu as pltpu

# ---- configuration (the `args` of the torch module) -------------------------
N_AGENTS = 4
N_ENEMIES = 3
N_FRIENDS = 8                                  # n_trainers
EMBED_DIM = 32
STATE_DIM = (5 + N_ENEMIES) * N_AGENTS         # 32
QMIX_NS = False

BATCH = 2
SEQ = 8
N = BATCH * SEQ                                # flattened sample count

# fused hypernet weight column layout (the 32-wide heads padded to 128 lanes)
_TE = N_FRIENDS * EMBED_DIM                    # 256 (HW1 block, trainer-major)
_PAD_BLK = 128
_C_W1 = 0
_C_B1 = _TE                                    # 256
_C_W2 = _C_B1 + _PAD_BLK                       # 384
_C_H = _C_W2 + _PAD_BLK                        # 512
_CAT_COLS = _C_H + _PAD_BLK                    # 640


# ---- Pallas kernel -----------------------------------------------------------
def qmixer_kernel(q_ref, s_ref, wcat_ref, bcat_ref, b2w_ref, b2b_ref, o_ref):
    # Single fused hypernetwork matmul: bf16 MXU inputs, f32 accumulation.
    s_bf = s_ref[...].astype(jnp.bfloat16)      # no-op when states arrive bf16
    cat = (jnp.dot(s_bf, wcat_ref[...],
                   preferred_element_type=jnp.float32)
           + bcat_ref[...])                                     # (tn, 640) f32

    w1 = jnp.abs(cat[:, _C_W1:_C_W1 + _TE])                     # (tn, T*E)
    b1 = cat[:, _C_B1:_C_B1 + EMBED_DIM]                        # (tn, E)
    w2 = jnp.abs(cat[:, _C_W2:_C_W2 + EMBED_DIM])               # (tn, E)
    h = jnp.maximum(cat[:, _C_H:_C_H + EMBED_DIM], 0.0)         # (tn, E)

    # bmm(W1, agent_qs): q expansion done in-kernel (exact f32, no q_rep in
    # HBM) as 8 broadcasted multiply-adds over the trainer-major W1 blocks.
    q = q_ref[...]                                              # (tn, T) f32
    qw1 = w1[:, 0:EMBED_DIM] * q[:, 0:1]
    for t in range(1, N_FRIENDS):                               # static unroll
        qw1 = qw1 + w1[:, t * EMBED_DIM:(t + 1) * EMBED_DIM] * q[:, t:t + 1]

    x = qw1 + b1
    qb1 = jnp.where(x > 0, x, jnp.exp(jnp.minimum(x, 0.0)) - 1.0)  # ELU(1)

    # bmm(W2, Qb1) and the Hb2 output layer folded into one lane reduction.
    o = (jnp.sum(w2 * qb1 + h * b2w_ref[...], axis=-1, keepdims=True)
         + b2b_ref[...])                                        # (tn, 1)
    o_ref[...] = o.astype(o_ref.dtype)


# ---- wrapper -----------------------------------------------------------------
def _pick_tile(n, cap=1024):
    """Row tile: as large as possible (cap 1024, per-step overhead ~0.35us),
    multiple of 16 when feasible (native bf16 state tiling), and >= 2 grid
    steps whenever n > 8 so both v7x TensorCores get work."""
    if n <= 16:
        return 8                                   # 2 steps for 8 < n <= 16
    tn = min(cap, ((n // 2) + 15) // 16 * 16)      # >= 2 steps, multiple of 16
    return max(16, tn)


def qmixer_forward(agent_qs, states, kparams, *, tn=None):
    """agent_qs: (N, n_trainers); states: (..., state_dim) -> (N, 1) f32."""
    states = states.reshape(-1, STATE_DIM)
    if QMIX_NS:
        states = jnp.zeros_like(states)
    n = agent_qs.shape[0]
    assert states.shape[0] == n

    if tn is None:
        tn = _pick_tile(n)
    grid = (pl.cdiv(n, tn),)                       # no wrapper-side padding

    q_in = agent_qs.astype(jnp.float32)            # raw q; expanded in-kernel
    # bf16 states halve the dominant remaining DMA; requires a row tile that is
    # a multiple of 16 (bf16 sublane packing), otherwise keep f32 + in-kernel
    # cast (numerically identical: the matmul operand is bf16 either way).
    s_dtype = jnp.bfloat16 if tn % 16 == 0 else jnp.float32
    s_in = states.astype(s_dtype)

    wcat, bcat, b2w, b2b = kparams

    def row_spec(last):
        return pl.BlockSpec((tn, last), lambda i: (i, 0))

    def full_spec(shape):
        return pl.BlockSpec(shape, lambda i: (0, 0))

    return pl.pallas_call(
        qmixer_kernel,
        out_shape=jax.ShapeDtypeStruct((n, 1), jnp.float32),
        grid=grid,
        in_specs=[
            row_spec(N_FRIENDS),                   # agent_qs (raw, f32)
            row_spec(STATE_DIM),                   # states (bf16 when allowed)
            full_spec(wcat.shape),                 # fused hypernet weights bf16
            full_spec(bcat.shape),                 # fused hypernet biases f32
            full_spec(b2w.shape),                  # Hb2 output-layer weight row
            full_spec(b2b.shape),                  # Hb2 output-layer bias
        ],
        out_specs=row_spec(1),
        compiler_params=pltpu.CompilerParams(
            dimension_semantics=("parallel",)),
    )(q_in, s_in, wcat, bcat, b2w, b2b)


# ---- parameter setup (deterministic, torch-Linear shapes) --------------------
def init_params(key):
    ks = jax.random.split(key, 10)
    scale = 0.1

    def lin(kw, kb, out_f, in_f):
        w = scale * jax.random.normal(kw, (out_f, in_f), jnp.float32)
        b = scale * jax.random.normal(kb, (out_f,), jnp.float32)
        return w, b

    p = {}
    p['HW1_w'], p['HW1_b'] = lin(ks[0], ks[1], EMBED_DIM * N_FRIENDS, STATE_DIM)
    p['Hb1_w'], p['Hb1_b'] = lin(ks[2], ks[3], EMBED_DIM, STATE_DIM)
    p['HW2_w'], p['HW2_b'] = lin(ks[4], ks[5], EMBED_DIM, STATE_DIM)
    p['Hb2a_w'], p['Hb2a_b'] = lin(ks[6], ks[7], EMBED_DIM, STATE_DIM)
    p['Hb2b_w'], p['Hb2b_b'] = lin(ks[8], ks[9], 1, EMBED_DIM)
    return p


def kernel_params(p):
    """Fold torch-layout params into the kernel's fused (in, out) layout.

    HW1 output columns are permuted from (e*T + t) to trainer-major (t*E + e);
    the three 32-wide heads are zero-padded to 128-lane blocks and all four are
    concatenated into a single (state_dim, 640) bf16 matmul operand."""
    hw1_w = (p['HW1_w']                        # (E*T, S), row index = e*T + t
             .reshape(EMBED_DIM, N_FRIENDS, STATE_DIM)
             .transpose(1, 0, 2)               # (T, E, S)
             .reshape(N_FRIENDS * EMBED_DIM, STATE_DIM)
             .T)                               # (S, T*E)
    hw1_b = (p['HW1_b']
             .reshape(EMBED_DIM, N_FRIENDS)
             .T.reshape(N_FRIENDS * EMBED_DIM))

    def padded(w_t, b, width=_PAD_BLK):
        k = w_t.shape[1]
        wp = jnp.zeros((STATE_DIM, width), jnp.float32).at[:, :k].set(w_t)
        bp = jnp.zeros((width,), jnp.float32).at[:k].set(b)
        return wp, bp

    b1_w, b1_b = padded(p['Hb1_w'].T, p['Hb1_b'])
    w2_w, w2_b = padded(p['HW2_w'].T, p['HW2_b'])
    h_w, h_b = padded(p['Hb2a_w'].T, p['Hb2a_b'])

    wcat = jnp.concatenate([hw1_w, b1_w, w2_w, h_w], axis=1).astype(jnp.bfloat16)
    bcat = jnp.concatenate([hw1_b, b1_b, w2_b, h_b]).reshape(1, -1)  # f32
    assert wcat.shape == (STATE_DIM, _CAT_COLS)
    b2w = p['Hb2b_w'].reshape(1, EMBED_DIM)        # folded into lane reduction
    b2b = p['Hb2b_b'].reshape(1, 1)
    return wcat, bcat, b2w, b2b


# ---- pure-JAX reference (mirrors the torch forward exactly) -------------------
def reference(agent_qs, states, p, *, matmul_dtype=jnp.float32):
    """matmul_dtype=jnp.bfloat16 reproduces the kernel's bf16-input / f32-acc
    hypernet matmuls; jnp.float32 is the exact reference."""
    hi = jax.lax.Precision.HIGHEST
    q = agent_qs[:, :, None]                                   # unsqueeze(-1)
    s = states.reshape(-1, STATE_DIM)
    if QMIX_NS:
        s = jnp.zeros_like(s)
    sm = s.astype(matmul_dtype)

    def lin(w, b):
        return jnp.dot(sm, w.T.astype(matmul_dtype),
                       preferred_element_type=jnp.float32, precision=hi) + b

    W1 = jnp.abs(lin(p['HW1_w'], p['HW1_b'])).reshape(-1, EMBED_DIM, N_FRIENDS)
    b1 = lin(p['Hb1_w'], p['Hb1_b']).reshape(-1, EMBED_DIM, 1)
    W2 = jnp.abs(lin(p['HW2_w'], p['HW2_b'])).reshape(-1, 1, EMBED_DIM)
    h = jax.nn.relu(lin(p['Hb2a_w'], p['Hb2a_b']))
    b2 = (jnp.dot(h, p['Hb2b_w'].T, precision=hi) + p['Hb2b_b']).reshape(-1, 1, 1)
    QW1 = jnp.einsum('net,ntk->nek', W1, q, precision=hi)
    Qb1 = jax.nn.elu(QW1 + b1)
    QW2 = jnp.einsum('nke,nej->nkj', W2, Qb1, precision=hi)
    Qtot = QW2 + b2
    return Qtot.squeeze(-1)                                    # (N, 1)


if __name__ == "__main__":
    key = jax.random.PRNGKey(0)
    kp, kq, ks, kq2, ks2 = jax.random.split(key, 5)

    params = init_params(kp)
    kparams = kernel_params(params)

    # Case 1: the module's small shapes (batch=2, seq=8) -> N=16, tn=8, grid=(2,).
    agent_qs = jax.random.normal(kq, (N, N_FRIENDS), jnp.float32)         # (16, 8)
    states = jax.random.normal(ks, (BATCH, SEQ, STATE_DIM), jnp.float32)  # (2, 8, 32)

    out = jax.block_until_ready(qmixer_forward(agent_qs, states, kparams))
    assert out.shape == (N, 1), out.shape

    # Tight check vs. a reference using the same bf16-input / f32-acc matmuls.
    ref_bf16 = jax.block_until_ready(
        reference(agent_qs, states, params, matmul_dtype=jnp.bfloat16))
    np.testing.assert_allclose(np.asarray(out), np.asarray(ref_bf16),
                               rtol=1e-3, atol=1e-3)

    # Loose sanity check vs. the full-f32 reference (bf16 MXU input rounding).
    ref_f32 = jax.block_until_ready(reference(agent_qs, states, params))
    np.testing.assert_allclose(np.asarray(out), np.asarray(ref_f32),
                               rtol=5e-2, atol=1e-1)

    # Case 2: exercises the bf16-states path and the masked partial edge block
    # (N=40, tn=32 -> grid=(2,), last tile has 8 valid rows, no wrapper pad).
    n2 = 40
    agent_qs2 = jax.random.normal(kq2, (n2, N_FRIENDS), jnp.float32)
    states2 = jax.random.normal(ks2, (n2, STATE_DIM), jnp.float32)
    out2 = jax.block_until_ready(qmixer_forward(agent_qs2, states2, kparams))
    assert out2.shape == (n2, 1), out2.shape
    ref2 = jax.block_until_ready(
        reference(agent_qs2, states2, params, matmul_dtype=jnp.bfloat16))
    np.testing.assert_allclose(np.asarray(out2), np.asarray(ref2),
                               rtol=1e-3, atol=1e-3)

    print("KERNEL_OK")
</pallas_src>

<mosaic_0001>
module attributes {stable_mosaic.version = 11 : i64} {
  func.func @qmixer_kernel(%arg0: i32, %arg1: memref<8x8xf32, #tpu.memory_space<vmem>>, %arg2: memref<8x32xf32, #tpu.memory_space<vmem>>, %arg3: memref<32x640xbf16, #tpu.memory_space<vmem>>, %arg4: memref<1x640xf32, #tpu.memory_space<vmem>>, %arg5: memref<1x32xf32, #tpu.memory_space<vmem>>, %arg6: memref<1x1xf32, #tpu.memory_space<vmem>>, %arg7: memref<8x1xf32, #tpu.memory_space<vmem>>) attributes {dimension_semantics = [#tpu.dimension_semantics<parallel>], iteration_bounds = array<i64: 2>, scalar_prefetch = 0 : i64, scratch_operands = 0 : i64, tpu.core_type = #tpu.core_type<tc>, window_params = [{transform_indices = @transform_0, window_bounds = array<i64: 8, 8>}, {transform_indices = @transform_1, window_bounds = array<i64: 8, 32>}, {pipeline_mode = #tpu.pipeline_mode<synchronous>, transform_indices = @transform_2, window_bounds = array<i64: 32, 640>}, {pipeline_mode = #tpu.pipeline_mode<synchronous>, transform_indices = @transform_3, window_bounds = array<i64: 1, 640>}, {pipeline_mode = #tpu.pipeline_mode<synchronous>, transform_indices = @transform_4, window_bounds = array<i64: 1, 32>}, {pipeline_mode = #tpu.pipeline_mode<synchronous>, transform_indices = @transform_5, window_bounds = array<i64: 1, 1>}, {transform_indices = @transform_6, window_bounds = array<i64: 8, 1>}]} {
    %c0 = arith.constant 0 : index
    %c0_0 = arith.constant 0 : index
    %0 = vector.load %arg2[%c0, %c0_0] : memref<8x32xf32, #tpu.memory_space<vmem>>, vector<8x32xf32>
    %1 = arith.truncf %0 : vector<8x32xf32> to vector<8x32xbf16>
    %c0_1 = arith.constant 0 : index
    %c0_2 = arith.constant 0 : index
    %2 = vector.load %arg3[%c0_1, %c0_2] : memref<32x640xbf16, #tpu.memory_space<vmem>>, vector<32x640xbf16>
    %cst = arith.constant dense<0.000000e+00> : vector<8x640xf32>
    %3 = tpu.matmul %1, %2, %cst {dimension_numbers = #tpu.dot_dimension_numbers<[1], [0], [0], [1], [0, 0, 1, 1], [], []>} : vector<8x32xbf16>, vector<32x640xbf16>, vector<8x640xf32> -> vector<8x640xf32>
    %c0_3 = arith.constant 0 : index
    %c0_4 = arith.constant 0 : index
    %4 = vector.load %arg4[%c0_3, %c0_4] : memref<1x640xf32, #tpu.memory_space<vmem>>, vector<1x640xf32>
    %5 = vector.broadcast %4 : vector<1x640xf32> to vector<8x640xf32>
    %6 = arith.addf %3, %5 : vector<8x640xf32>
    %7 = vector.extract_strided_slice %6 {offsets = [0, 0], sizes = [8, 256], strides = [1, 1]} : vector<8x640xf32> to vector<8x256xf32>
    %8 = math.absf %7 : vector<8x256xf32>
    %9 = vector.extract_strided_slice %6 {offsets = [0, 256], sizes = [8, 32], strides = [1, 1]} : vector<8x640xf32> to vector<8x32xf32>
    %10 = vector.extract_strided_slice %6 {offsets = [0, 384], sizes = [8, 32], strides = [1, 1]} : vector<8x640xf32> to vector<8x32xf32>
    %11 = math.absf %10 : vector<8x32xf32>
    %12 = vector.extract_strided_slice %6 {offsets = [0, 512], sizes = [8, 32], strides = [1, 1]} : vector<8x640xf32> to vector<8x32xf32>
    %cst_5 = arith.constant 0.000000e+00 : f32
    %13 = vector.broadcast %cst_5 : f32 to vector<8x32xf32>
    %14 = arith.maximumf %12, %13 : vector<8x32xf32>
    %c0_6 = arith.constant 0 : index
    %c0_7 = arith.constant 0 : index
    %15 = vector.load %arg1[%c0_6, %c0_7] : memref<8x8xf32, #tpu.memory_space<vmem>>, vector<8x8xf32>
    %16 = vector.extract_strided_slice %8 {offsets = [0, 0], sizes = [8, 32], strides = [1, 1]} : vector<8x256xf32> to vector<8x32xf32>
    %17 = vector.extract_strided_slice %15 {offsets = [0, 0], sizes = [8, 1], strides = [1, 1]} : vector<8x8xf32> to vector<8x1xf32>
    %18 = vector.broadcast %17 : vector<8x1xf32> to vector<8x32xf32>
    %19 = arith.mulf %16, %18 : vector<8x32xf32>
    %20 = vector.extract_strided_slice %8 {offsets = [0, 32], sizes = [8, 32], strides = [1, 1]} : vector<8x256xf32> to vector<8x32xf32>
    %21 = vector.extract_strided_slice %15 {offsets = [0, 1], sizes = [8, 1], strides = [1, 1]} : vector<8x8xf32> to vector<8x1xf32>
    %22 = vector.broadcast %21 : vector<8x1xf32> to vector<8x32xf32>
    %23 = arith.mulf %20, %22 : vector<8x32xf32>
    %24 = arith.addf %19, %23 : vector<8x32xf32>
    %25 = vector.extract_strided_slice %8 {offsets = [0, 64], sizes = [8, 32], strides = [1, 1]} : vector<8x256xf32> to vector<8x32xf32>
    %26 = vector.extract_strided_slice %15 {offsets = [0, 2], sizes = [8, 1], strides = [1, 1]} : vector<8x8xf32> to vector<8x1xf32>
    %27 = vector.broadcast %26 : vector<8x1xf32> to vector<8x32xf32>
    %28 = arith.mulf %25, %27 : vector<8x32xf32>
    %29 = arith.addf %24, %28 : vector<8x32xf32>
    %30 = vector.extract_strided_slice %8 {offsets = [0, 96], sizes = [8, 32], strides = [1, 1]} : vector<8x256xf32> to vector<8x32xf32>
    %31 = vector.extract_strided_slice %15 {offsets = [0, 3], sizes = [8, 1], strides = [1, 1]} : vector<8x8xf32> to vector<8x1xf32>
    %32 = vector.broadcast %31 : vector<8x1xf32> to vector<8x32xf32>
    %33 = arith.mulf %30, %32 : vector<8x32xf32>
    %34 = arith.addf %29, %33 : vector<8x32xf32>
    %35 = vector.extract_strided_slice %8 {offsets = [0, 128], sizes = [8, 32], strides = [1, 1]} : vector<8x256xf32> to vector<8x32xf32>
    %36 = vector.extract_strided_slice %15 {offsets = [0, 4], sizes = [8, 1], strides = [1, 1]} : vector<8x8xf32> to vector<8x1xf32>
    %37 = vector.broadcast %36 : vector<8x1xf32> to vector<8x32xf32>
    %38 = arith.mulf %35, %37 : vector<8x32xf32>
    %39 = arith.addf %34, %38 : vector<8x32xf32>
    %40 = vector.extract_strided_slice %8 {offsets = [0, 160], sizes = [8, 32], strides = [1, 1]} : vector<8x256xf32> to vector<8x32xf32>
    %41 = vector.extract_strided_slice %15 {offsets = [0, 5], sizes = [8, 1], strides = [1, 1]} : vector<8x8xf32> to vector<8x1xf32>
    %42 = vector.broadcast %41 : vector<8x1xf32> to vector<8x32xf32>
    %43 = arith.mulf %40, %42 : vector<8x32xf32>
    %44 = arith.addf %39, %43 : vector<8x32xf32>
    %45 = vector.extract_strided_slice %8 {offsets = [0, 192], sizes = [8, 32], strides = [1, 1]} : vector<8x256xf32> to vector<8x32xf32>
    %46 = vector.extract_strided_slice %15 {offsets = [0, 6], sizes = [8, 1], strides = [1, 1]} : vector<8x8xf32> to vector<8x1xf32>
    %47 = vector.broadcast %46 : vector<8x1xf32> to vector<8x32xf32>
    %48 = arith.mulf %45, %47 : vector<8x32xf32>
    %49 = arith.addf %44, %48 : vector<8x32xf32>
    %50 = vector.extract_strided_slice %8 {offsets = [0, 224], sizes = [8, 32], strides = [1, 1]} : vector<8x256xf32> to vector<8x32xf32>
    %51 = vector.extract_strided_slice %15 {offsets = [0, 7], sizes = [8, 1], strides = [1, 1]} : vector<8x8xf32> to vector<8x1xf32>
    %52 = vector.broadcast %51 : vector<8x1xf32> to vector<8x32xf32>
    %53 = arith.mulf %50, %52 : vector<8x32xf32>
    %54 = arith.addf %49, %53 : vector<8x32xf32>
    %55 = arith.addf %54, %9 : vector<8x32xf32>
    %cst_8 = arith.constant 0.000000e+00 : f32
    %56 = vector.broadcast %cst_8 : f32 to vector<8x32xf32>
    %57 = arith.cmpf ogt, %55, %56 : vector<8x32xf32>
    %cst_9 = arith.constant 0.000000e+00 : f32
    %58 = vector.broadcast %cst_9 : f32 to vector<8x32xf32>
    %59 = arith.minimumf %55, %58 : vector<8x32xf32>
    %60 = math.exp %59 : vector<8x32xf32>
    %cst_10 = arith.constant 1.000000e+00 : f32
    %61 = vector.broadcast %cst_10 : f32 to vector<8x32xf32>
    %62 = arith.subf %60, %61 : vector<8x32xf32>
    %63 = arith.select %57, %55, %62 : vector<8x32xi1>, vector<8x32xf32>
    %64 = arith.mulf %11, %63 : vector<8x32xf32>
    %c0_11 = arith.constant 0 : index
    %c0_12 = arith.constant 0 : index
    %65 = vector.load %arg5[%c0_11, %c0_12] : memref<1x32xf32, #tpu.memory_space<vmem>>, vector<1x32xf32>
    %66 = vector.broadcast %65 : vector<1x32xf32> to vector<8x32xf32>
    %67 = arith.mulf %14, %66 : vector<8x32xf32>
    %68 = arith.addf %64, %67 : vector<8x32xf32>
    %cst_13 = arith.constant dense<0.000000e+00> : vector<8xf32>
    %69 = vector.multi_reduction <add>, %68, %cst_13 [1] : vector<8x32xf32> to vector<8xf32>
    %70 = vector.shape_cast %69 : vector<8xf32> to vector<8x1xf32>
    %c0_14 = arith.constant 0 : index
    %c0_15 = arith.constant 0 : index
    %71 = vector.load %arg6[%c0_14, %c0_15] : memref<1x1xf32, #tpu.memory_space<vmem>>, vector<1x1xf32>
    %72 = vector.broadcast %71 : vector<1x1xf32> to vector<8x1xf32>
    %73 = arith.addf %70, %72 : vector<8x1xf32>
    %c0_16 = arith.constant 0 : index
    %c0_17 = arith.constant 0 : index
    %74 = vector.load %arg7[%c0_16, %c0_17] : memref<8x1xf32, #tpu.memory_space<vmem>>, vector<8x1xf32>
    tpu.vector_store %arg7[%c0_16, %c0_17], %73 {strides = array<i32>} : memref<8x1xf32, #tpu.memory_space<vmem>>, vector<8x1xf32>,
    return
  }
  func.func @transform_0(%arg0: i32) -> (i32, i32) {
    %c0_i32 = arith.constant 0 : i32
    %c0_i32_0 = arith.constant 0 : i32
    return %arg0, %c0_i32 : i32, i32
  }
  func.func @transform_1(%arg0: i32) -> (i32, i32) {
    %c0_i32 = arith.constant 0 : i32
    %c0_i32_0 = arith.constant 0 : i32
    return %arg0, %c0_i32 : i32, i32
  }
  func.func @transform_2(%arg0: i32) -> (i32, i32) {
    %c0_i32 = arith.constant 0 : i32
    %c0_i32_0 = arith.constant 0 : i32
    %c0_i32_1 = arith.constant 0 : i32
    return %c0_i32, %c0_i32_0 : i32, i32
  }
  func.func @transform_3(%arg0: i32) -> (i32, i32) {
    %c0_i32 = arith.constant 0 : i32
    %c0_i32_0 = arith.constant 0 : i32
    %c0_i32_1 = arith.constant 0 : i32
    return %c0_i32, %c0_i32_0 : i32, i32
  }
  func.func @transform_4(%arg0: i32) -> (i32, i32) {
    %c0_i32 = arith.constant 0 : i32
    %c0_i32_0 = arith.constant 0 : i32
    %c0_i32_1 = arith.constant 0 : i32
    return %c0_i32, %c0_i32_0 : i32, i32
  }
  func.func @transform_5(%arg0: i32) -> (i32, i32) {
    %c0_i32 = arith.constant 0 : i32
    %c0_i32_0 = arith.constant 0 : i32
    %c0_i32_1 = arith.constant 0 : i32
    return %c0_i32, %c0_i32_0 : i32, i32
  }
  func.func @transform_6(%arg0: i32) -> (i32, i32) {
    %c0_i32 = arith.constant 0 : i32
    %c0_i32_0 = arith.constant 0 : i32
    return %arg0, %c0_i32 : i32, i32
  }
}

</mosaic_0001>

<llo_original>
// kernel: tpu_custom_call.1
$region0: #{tpu_custom_call.1}
  #allocation0 [shape = 'u32[]', space=smem, size = 0x4, offset = 0x4, fixed_abs, tag = 'smem constant byte address 0x4 - core index']
  #allocation1 [shape = 'u32[144,128]{1,0:T(1,128)}', space=vmem, size = 0x12000, scoped, tag = 'internal scratch']
  #allocation2 [shape = 'f32[1,1]{1,0:T(1,128)S(1)}', space=vmem, size = 0x200, scoped, tag = 'scoped memory for tpu_custom_call.1']
  %s0 = inlined_call_operand.vmem [shape: f32[16,8], index: 0, kind: input, shape index: {}]
  %s1 = inlined_call_operand.vmem [shape: f32[16,32], index: 1, kind: input, shape index: {}]
  %s2 = inlined_call_operand.hbm [shape: bf16[32,640], index: 2, kind: input, shape index: {}]
  %s3 = inlined_call_operand.vmem [shape: f32[1,640], index: 3, kind: input, shape index: {}]
  %s4 = inlined_call_operand.vmem [shape: f32[1,32], index: 4, kind: input, shape index: {}]
  %s5 = inlined_call_operand.<no memory space> [shape: f32[1,1], index: 5, kind: input, shape index: {}]
  %s6 = inlined_call_operand.vmem [shape: f32[16,1], index: 6, kind: output, shape index: {}]
  %s7 = sld [smem:[#allocation0]]
  $region61: #{tpu_custom_call.1} parent=0
    _
  %s9 = ssub.s32 1, %s7
  %s10 = scalar_select 0, %s9, %s7
  %v11 = vstv %s5
  %12 = vst [vmem:[#allocation2] sm:$0x1] %v11
  $region1: #{tpu_custom_call.1} parent=0
    #allocation3 [shape = 'u8[40960]{0}', space=vmem, size = 0xa000, scoped, tag = 'input window, operand 2, single buffered']
    #allocation4 [shape = 's32[2]{0}', space=sflag, size = 0x8, scoped, tag = 'scoped memory for tpu_custom_call.1']
    %13 = vsyncpa [#allocation4], 0
    loop: start=0, step=1, limit=4
    $region2: #{tpu_custom_call.1} parent=1 // loop_pre_header
      _
    $region3: #{tpu_custom_call.1} parent=1 // loop_header
      %s15 = sphi 0, %s19
      %p16 = scmp.ge.s32.totalorder %s15, 4
      %s25 = sphi 0, %s27
      %s28 = sphi 0, %s25
      %s29 = sphi 0, %s28
      %s45 = sphi 0, %s29
      %s51 = sphi 0, %s53
      %s54 = sphi 0, %s51
      %s55 = sphi 0, %s54
      %s71 = sphi 0, %s55
      %s75 = sphi 0, %s75
      %s77 = sphi 0, %s75
      %s78 = sphi 0, %s77
      %s92 = sphi 0, %s78
      %s96 = sphi 0, %s96
      %s98 = sphi 0, %s96
      %s99 = sphi 0, %s98
      %s113 = sphi 0, %s99
      %s117 = sphi 0, %s117
      %s119 = sphi 0, %s117
      %s120 = sphi 0, %s119
      %s134 = sphi 0, %s120
      %s138 = sphi 0, %s138
      %s140 = sphi 0, %s138
      %s141 = sphi 0, %s140
      %s155 = sphi 0, %s141
      %s161 = sphi 0, %s163
      %s164 = sphi 0, %s161
      %s165 = sphi 0, %s164
      %s181 = sphi 0, %s165
    $region4: #{tpu_custom_call.1} parent=1 // loop_header_branch
      %18 = sbr.rel (%p16) target = $region8
    $region5: #{tpu_custom_call.1} parent=1 // loop_body
      %s20 = ssub.s32 %s15, 1
      %s21 = ssub.s32 %s15, 2
      %s22 = sadd.s32 %s15, 1
      %s23 = ssub.s32 %s15, %s22
      %p24 = scmp.eq.s32.totalorder %s23, 0
      %s26 = sadd.s32 %s25, 1
      %s27 = scalar_select %p24, %s25, %s26
      %p30 = pneg %p24
      %p31 = scmp.eq.s32.totalorder %s15, 1
      %p32 = por %p30, %p31
      %p33 = scmp.ne.s32.totalorder %s25, %s28
      %p34 = scmp.eq.s32.totalorder %s15, 0
      %p35 = por %p33, %p34
      %p36 = scmp.ne.s32.totalorder %s25, %s28
      %p37 = scmp.eq.s32.totalorder %s20, 1
      %p38 = por %p36, %p37
      %p39 = scmp.ne.s32.totalorder %s28, %s29
      %p40 = scmp.eq.s32.totalorder %s20, 0
      %p41 = por %p39, %p40
      %p42 = scmp.ne.s32.totalorder %s28, %s29
      %p43 = scmp.eq.s32.totalorder %s21, 1
      %p44 = por %p42, %p43
      %p46 = scmp.ne.s32.totalorder %s29, %s45
      %p47 = scmp.eq.s32.totalorder %s21, 0
      %p48 = por %p46, %p47
      %s49 = ssub.s32 %s15, %s22
      %p50 = scmp.eq.s32.totalorder %s49, 0
      %s52 = sadd.s32 %s51, 1
      %s53 = scalar_select %p50, %s51, %s52
      %p56 = pneg %p50
      %p57 = scmp.eq.s32.totalorder %s15, 1
      %p58 = por %p56, %p57
      %p59 = scmp.ne.s32.totalorder %s51, %s54
      %p60 = scmp.eq.s32.totalorder %s15, 0
      %p61 = por %p59, %p60
      %p62 = scmp.ne.s32.totalorder %s51, %s54
      %p63 = scmp.eq.s32.totalorder %s20, 1
      %p64 = por %p62, %p63
      %p65 = scmp.ne.s32.totalorder %s54, %s55
      %p66 = scmp.eq.s32.totalorder %s20, 0
      %p67 = por %p65, %p66
      %p68 = scmp.ne.s32.totalorder %s54, %s55
      %p69 = scmp.eq.s32.totalorder %s21, 1
      %p70 = por %p68, %p69
      %p72 = scmp.ne.s32.totalorder %s55, %s71
      %p73 = scmp.eq.s32.totalorder %s21, 0
      %p74 = por %p72, %p73
      %s76 = sadd.s32 %s75, 1
      %p79 = scmp.eq.s32.totalorder %s15, 1
      %p80 = scmp.ne.s32.totalorder %s75, %s77
      %p81 = scmp.eq.s32.totalorder %s15, 0
      %p82 = por %p80, %p81
      %p83 = scmp.ne.s32.totalorder %s75, %s77
      %p84 = scmp.eq.s32.totalorder %s20, 1
      %p85 = por %p83, %p84
      %p86 = scmp.ne.s32.totalorder %s77, %s78
      %p87 = scmp.eq.s32.totalorder %s20, 0
      %p88 = por %p86, %p87
      %p89 = scmp.ne.s32.totalorder %s77, %s78
      %p90 = scmp.eq.s32.totalorder %s21, 1
      %p91 = por %p89, %p90
      %p93 = scmp.ne.s32.totalorder %s78, %s92
      %p94 = scmp.eq.s32.totalorder %s21, 0
      %p95 = por %p93, %p94
      %s97 = sadd.s32 %s96, 1
      %p100 = scmp.eq.s32.totalorder %s15, 1
      %p101 = scmp.ne.s32.totalorder %s96, %s98
      %p102 = scmp.eq.s32.totalorder %s15, 0
      %p103 = por %p101, %p102
      %p104 = scmp.ne.s32.totalorder %s96, %s98
      %p105 = scmp.eq.s32.totalorder %s20, 1
      %p106 = por %p104, %p105
      %p107 = scmp.ne.s32.totalorder %s98, %s99
      %p108 = scmp.eq.s32.totalorder %s20, 0
      %p109 = por %p107, %p108
      %p110 = scmp.ne.s32.totalorder %s98, %s99
      %p111 = scmp.eq.s32.totalorder %s21, 1
      %p112 = por %p110, %p111
      %p114 = scmp.ne.s32.totalorder %s99, %s113
      %p115 = scmp.eq.s32.totalorder %s21, 0
      %p116 = por %p114, %p115
      %s118 = sadd.s32 %s117, 1
      %p121 = scmp.eq.s32.totalorder %s15, 1
      %p122 = scmp.ne.s32.totalorder %s117, %s119
      %p123 = scmp.eq.s32.totalorder %s15, 0
      %p124 = por %p122, %p123
      %p125 = scmp.ne.s32.totalorder %s117, %s119
      %p126 = scmp.eq.s32.totalorder %s20, 1
      %p127 = por %p125, %p126
      %p128 = scmp.ne.s32.totalorder %s119, %s120
      %p129 = scmp.eq.s32.totalorder %s20, 0
      %p130 = por %p128, %p129
      %p131 = scmp.ne.s32.totalorder %s119, %s120
      %p132 = scmp.eq.s32.totalorder %s21, 1
      %p133 = por %p131, %p132
      %p135 = scmp.ne.s32.totalorder %s120, %s134
      %p136 = scmp.eq.s32.totalorder %s21, 0
      %p137 = por %p135, %p136
      %s139 = sadd.s32 %s138, 1
      %p142 = scmp.eq.s32.totalorder %s15, 1
      %p143 = scmp.ne.s32.totalorder %s138, %s140
      %p144 = scmp.eq.s32.totalorder %s15, 0
      %p145 = por %p143, %p144
      %p146 = scmp.ne.s32.totalorder %s138, %s140
      %p147 = scmp.eq.s32.totalorder %s20, 1
      %p148 = por %p146, %p147
      %p149 = scmp.ne.s32.totalorder %s140, %s141
      %p150 = scmp.eq.s32.totalorder %s20, 0
      %p151 = por %p149, %p150
      %p152 = scmp.ne.s32.totalorder %s140, %s141
      %p153 = scmp.eq.s32.totalorder %s21, 1
      %p154 = por %p152, %p153
      %p156 = scmp.ne.s32.totalorder %s141, %s155
      %p157 = scmp.eq.s32.totalorder %s21, 0
      %p158 = por %p156, %p157
      %s159 = ssub.s32 %s15, %s22
      %p160 = scmp.eq.s32.totalorder %s159, 0
      %s162 = sadd.s32 %s161, 1
      %s163 = scalar_select %p160, %s161, %s162
      %p166 = pneg %p160
      %p167 = scmp.eq.s32.totalorder %s15, 1
      %p168 = por %p166, %p167
      %p169 = scmp.ne.s32.totalorder %s161, %s164
      %p170 = scmp.eq.s32.totalorder %s15, 0
      %p171 = por %p169, %p170
      %p172 = scmp.ne.s32.totalorder %s161, %s164
      %p173 = scmp.eq.s32.totalorder %s20, 1
      %p174 = por %p172, %p173
      %p175 = scmp.ne.s32.totalorder %s164, %s165
      %p176 = scmp.eq.s32.totalorder %s20, 0
      %p177 = por %p175, %p176
      %p178 = scmp.ne.s32.totalorder %s164, %s165
      %p179 = scmp.eq.s32.totalorder %s21, 1
      %p180 = por %p178, %p179
      %p182 = scmp.ne.s32.totalorder %s165, %s181
      %p183 = scmp.eq.s32.totalorder %s21, 0
      %p184 = por %p182, %p183
      %p185 = scmp.le.s32.totalorder 1, %s15
      %p186 = scmp.lt.s32.totalorder %s15, 3
      %p187 = pnand %p185, %p186
      %p188 = pneg %p187
      // Predicated region
      $region9: #{tpu_custom_call.1} parent=5 // pred_check
        _
      $region10: #{tpu_custom_call.1} parent=5 // pred_check_branch
        %190 = sbr.rel (%p187) target = $region12
      $region11: #{tpu_custom_call.1} parent=5 // pred_region
        %s191 = ssub.s32 %s15, 1
        // Predicated region
        $region13: #{tpu_custom_call.1} parent=11 // pred_check
          %p192 = pneg %p88
        $region14: #{tpu_custom_call.1} parent=11 // pred_check_branch
          %194 = sbr.rel (%p192) target = $region16
        $region15: #{tpu_custom_call.1} parent=11 // pred_region
          %s196 = ssub.s32 1280, 1280
          %197 = vsyncadd [#allocation4], %s196
          %s198 = sshll.u32 [#allocation3], 4
          %s199 = int_to_ptr.vmem [resolvable:$true] %s198
          %204 = dma.hbm_to_vmem [thread:$0]  %s2, 1280, %s199, [#allocation4], 320, 320, 20
        $region16: #{tpu_custom_call.1} parent=11 // pred_fallthru
          _
        // Predicated region
        $region17: #{tpu_custom_call.1} parent=11 // pred_check
          %p205 = pneg %p109
        $region18: #{tpu_custom_call.1} parent=11 // pred_check_branch
          %207 = sbr.rel (%p205) target = $region20
        $region19: #{tpu_custom_call.1} parent=11 // pred_region
          _
        $region20: #{tpu_custom_call.1} parent=11 // pred_fallthru
          _
        // Predicated region
        $region21: #{tpu_custom_call.1} parent=11 // pred_check
          %p208 = pneg %p130
        $region22: #{tpu_custom_call.1} parent=11 // pred_check_branch
          %210 = sbr.rel (%p208) target = $region24
        $region23: #{tpu_custom_call.1} parent=11 // pred_region
          _
        $region24: #{tpu_custom_call.1} parent=11 // pred_fallthru
          _
        // Predicated region
        $region25: #{tpu_custom_call.1} parent=11 // pred_check
          %p211 = pneg %p151
        $region26: #{tpu_custom_call.1} parent=11 // pred_check_branch
          %213 = sbr.rel (%p211) target = $region28
        $region27: #{tpu_custom_call.1} parent=11 // pred_region
          _
        $region28: #{tpu_custom_call.1} parent=11 // pred_fallthru
          _
      $region12: #{tpu_custom_call.1} parent=5 // pred_fallthru
        _
      %p214 = scmp.lt.s32.totalorder %s15, 2
      // Predicated region
      $region29: #{tpu_custom_call.1} parent=5 // pred_check
        %p215 = pneg %p214
      $region30: #{tpu_custom_call.1} parent=5 // pred_check_branch
        %217 = sbr.rel (%p215) target = $region32
      $region31: #{tpu_custom_call.1} parent=5 // pred_region
        // Predicated region
        $region33: #{tpu_custom_call.1} parent=31 // pred_check
          %p218 = pneg %p35
        $region34: #{tpu_custom_call.1} parent=31 // pred_check_branch
          %220 = sbr.rel (%p218) target = $region36
        $region35: #{tpu_custom_call.1} parent=31 // pred_region
          %p221 = scmp.lt.s32.totalorder %s15, 1
          %s222 = scalar_select %p221, %s15, 1
          %s223 = smul.addr %s222, 8
          %s224 = scalar_lea.vmem %s0, %s223
        $region36: #{tpu_custom_call.1} parent=31 // pred_fallthru
          _
        // Predicated region
        $region37: #{tpu_custom_call.1} parent=31 // pred_check
          %p225 = pneg %p61
        $region38: #{tpu_custom_call.1} parent=31 // pred_check_branch
          %227 = sbr.rel (%p225) target = $region40
        $region39: #{tpu_custom_call.1} parent=31 // pred_region
          %p228 = scmp.lt.s32.totalorder %s15, 1
          %s229 = scalar_select %p228, %s15, 1
          %s230 = smul.addr %s229, 8
          %s231 = scalar_lea.vmem %s1, %s230
        $region40: #{tpu_custom_call.1} parent=31 // pred_fallthru
          _
      $region32: #{tpu_custom_call.1} parent=5 // pred_fallthru
        _
      %p232 = scmp.le.s32.totalorder 1, %s15
      %p233 = scmp.lt.s32.totalorder %s15, 3
      %p234 = pnand %p232, %p233
      %p235 = pneg %p234
      // Predicated region
      $region41: #{tpu_custom_call.1} parent=5 // pred_check
        _
      $region42: #{tpu_custom_call.1} parent=5 // pred_check_branch
        %237 = sbr.rel (%p234) target = $region44
      $region43: #{tpu_custom_call.1} parent=5 // pred_region
        %s238 = ssub.s32 %s15, 1
        // Predicated region
        $region45: #{tpu_custom_call.1} parent=43 // pred_check
          %p239 = pneg %p88
        $region46: #{tpu_custom_call.1} parent=43 // pred_check_branch
          %241 = sbr.rel (%p239) target = $region48
        $region47: #{tpu_custom_call.1} parent=43 // pred_region
          %242 = dma.done [#allocation4], 1280
        $region48: #{tpu_custom_call.1} parent=43 // pred_fallthru
          _
        %p243 = scmp.lt.s32.totalorder %s20, 1
        %s244 = scalar_select %p243, %s20, 1
        %s245 = smul.addr %s244, 8
        %s246 = scalar_lea.vmem %s0, %s245
        %p247 = pneg %p41
        %p248 = pneg %p38
        %p249 = scmp.lt.s32.totalorder %s20, 1
        %s250 = scalar_select %p249, %s20, 1
        %s251 = smul.addr %s250, 8
        %s252 = scalar_lea.vmem %s1, %s251
        %p253 = pneg %p67
        %p254 = pneg %p64
        %p255 = pneg %p88
        %p256 = pneg %p85
        %p257 = pneg %p109
        %p258 = pneg %p106
        %p259 = pneg %p130
        %p260 = pneg %p127
        %p261 = pneg %p151
        %p262 = pneg %p148
        %p263 = pneg %p177
        %p264 = pneg %p174
        %p265 = scmp.lt.s32.totalorder %s20, 1
        %s266 = scalar_select %p265, %s20, 1
        %s267 = smul.addr %s266, 8
        %s268 = scalar_lea.vmem %s6, %s267
        %p269 = scmp.lt.s32.totalorder %s20, 1
        %s270 = scalar_select %p269, %s20, 1
        %s271 = smul.addr %s270, 8
        %s272 = scalar_lea.vmem %s0, %s271
        %p273 = scmp.lt.s32.totalorder %s20, 1
        %s274 = scalar_select %p273, %s20, 1
        %s275 = smul.addr %s274, 8
        %s276 = scalar_lea.vmem %s1, %s275
        %p277 = scmp.lt.s32.totalorder %s20, 1
        %s278 = scalar_select %p277, %s20, 1
        %s279 = smul.addr %s278, 8
        %s280 = scalar_lea.vmem %s6, %s279
        %v282 = vld [vmem:[%s276] sm:$0xff]
        %v283 = vpack.c.bf16 %v282, %v282
        %v284 = vld [vmem:[#allocation3] sm:$0xff]
        %v285 = vld [vmem:[#allocation3 + $0x8] sm:$0xff]
        %v286 = vld [vmem:[#allocation3 + $0x10] sm:$0xf]
        %v287 = vld [vmem:[#allocation3 + $0x14] sm:$0xff]
        %v288 = vld [vmem:[#allocation3 + $0x1c] sm:$0xff]
        %v289 = vld [vmem:[#allocation3 + $0x24] sm:$0xf]
        %v290 = vld [vmem:[#allocation3 + $0x28] sm:$0xff]
        %v291 = vld [vmem:[#allocation3 + $0x30] sm:$0xff]
        %v292 = vld [vmem:[#allocation3 + $0x38] sm:$0xf]
        %v293 = vld [vmem:[#allocation3 + $0x3c] sm:$0xff]
        %v294 = vld [vmem:[#allocation3 + $0x44] sm:$0xff]
        %v295 = vld [vmem:[#allocation3 + $0x4c] sm:$0xf]
        %v296 = vld [vmem:[%s3] sm:$0x1f]
        %v298 = vlaneseq
        %v299 = vshrl.u32 %v298, 7
        %v300 = vsub.s32 0, %v299
        %v301 = vrot.slane %v296, %v300
        %v302 = vlaneseq
        %v303 = vshrl.u32 %v302, 7
        %v304 = vsub.s32 1, %v303
        %v305 = vrot.slane %v296, %v304
        %v306 = vlaneseq
        %v307 = vshrl.u32 %v306, 7
        %v308 = vsub.s32 2, %v307
        %v309 = vrot.slane %v296, %v308
        %v310 = vlaneseq
        %v311 = vshrl.u32 %v310, 7
        %v312 = vsub.s32 3, %v311
        %v313 = vrot.slane %v296, %v312
        %v314 = vlaneseq
        %v315 = vshrl.u32 %v314, 7
        %v316 = vsub.s32 4, %v315
        %v317 = vrot.slane %v296, %v316
        %v335 = vunpack.c.l.b16 %v284
        %v336 = vunpack.c.h.b16 %v284
        %v337 = vunpack.c.l.b16 %v285
        %v338 = vunpack.c.h.b16 %v285
        %v339 = vunpack.c.l.b16 %v286
        %v340 = vunpack.c.l.b16 %v287
        %v341 = vunpack.c.h.b16 %v287
        %v342 = vunpack.c.l.b16 %v288
        %v343 = vunpack.c.h.b16 %v288
        %v344 = vunpack.c.l.b16 %v289
        %v345 = vunpack.c.l.b16 %v290
        %v346 = vunpack.c.h.b16 %v290
        %v347 = vunpack.c.l.b16 %v291
        %v348 = vunpack.c.h.b16 %v291
        %v349 = vunpack.c.l.b16 %v292
        %v350 = vunpack.c.l.b16 %v293
        %v351 = vunpack.c.h.b16 %v293
        %v352 = vunpack.c.l.b16 %v294
        %v353 = vunpack.c.h.b16 %v294
        %v354 = vunpack.c.l.b16 %v295
        %v355 = vpack.c.b16 %v340, %v335
        %v356 = vpack.c.b16 %v341, %v336
        %v357 = vpack.c.b16 %v342, %v337
        %v358 = vpack.c.b16 %v343, %v338
        %v359 = vpack.c.b16 %v344, %v339
        %v360 = vpack.c.b16 %v350, %v345
        %v361 = vpack.c.b16 %v351, %v346
        %v362 = vpack.c.b16 %v352, %v347
        %v363 = vpack.c.b16 %v353, %v348
        %v364 = vpack.c.b16 %v354, %v349
        %vm375 = vcmask 261120
        %v377 = vsel %vm375, %v283, 0
        %379 = vmatprep.subr.bf16.mxu0 %v356
        %380 = vmatpush1.bf16.msra.mxu0 %v355
        %381 = vmatprep.subr.bf16.mxu0 %v361
        %382 = vmatpush1.bf16.msra.mxu0 %v360
        %383 = vmatprep.subr.bf16.mxu0 0
        %384 = vmatpush1.bf16.msra.mxu0 0
        %385 = vmatprep.subr.bf16.mxu0 0
        %386 = vmatpush1.bf16.msra.mxu0 0
        %387 = vmatprep.subr.bf16.mxu0 0
        %388 = vmatpush1.bf16.msra.mxu0 0
        %389 = vmatprep.subr.bf16.mxu0 0
        %390 = vmatpush1.bf16.msra.mxu0 0
        %391 = vmatprep.subr.bf16.mxu0 0
        %392 = vmatpush1.bf16.msra.mxu0 0
        %393 = vmatprep.subr.bf16.mxu0 0
        %394 = vmatpush1.bf16.msra.mxu0 0
        %395 = vmatprep.subr.bf16.mxu0 0
        %396 = vmatpush1.bf16.msra.mxu0 0
        %397 = vmatprep.subr.bf16.mxu0 0
        %398 = vmatpush1.bf16.msra.mxu0 0
        %399 = vmatprep.subr.bf16.mxu0 0
        %400 = vmatpush1.bf16.msra.mxu0 0
        %401 = vmatprep.subr.bf16.mxu0 0
        %402 = vmatpush1.bf16.msra.mxu0 0
        %403 = vmatprep.subr.bf16.mxu0 0
        %404 = vmatpush1.bf16.msra.mxu0 0
        %405 = vmatprep.subr.bf16.mxu0 0
        %406 = vmatpush1.bf16.msra.mxu0 0
        %407 = vmatprep.subr.bf16.mxu0 0
        %408 = vmatpush1.bf16.msra.mxu0 0
        %409 = vmatprep.subr.bf16.mxu0 0
        %410 = vmatpush1.bf16.msra.mxu0 0
        %411 = vmatprep.mubr.bf16.mxu0 0
        %412 = vmatmul.mubr.bf16.gmra.mrb[0].mxu0 %v377
        %v413 = vpop.f32.mrb[0].mxu0
        %v414 = vadd.f32 %v301, %v413
        %v415 = vpop.f32.mrb[0].mxu0
        %v416 = vadd.f32 %v305, %v415
        %v417 = vpop.f32.mrb[0].mxu0
        %v418 = vpop.f32.mrb[0].mxu0
        %419 = vdwg.mxu0
        %420 = vmatprep.subr.bf16.mxu0 %v358
        %421 = vmatpush1.bf16.msra.mxu0 %v357
        %422 = vmatprep.subr.bf16.mxu0 %v363
        %423 = vmatpush1.bf16.msra.mxu0 %v362
        %424 = vmatprep.subr.bf16.mxu0 0
        %425 = vmatpush1.bf16.msra.mxu0 0
        %426 = vmatprep.subr.bf16.mxu0 0
        %427 = vmatpush1.bf16.msra.mxu0 0
        %428 = vmatprep.subr.bf16.mxu0 0
        %429 = vmatpush1.bf16.msra.mxu0 0
        %430 = vmatprep.subr.bf16.mxu0 0
        %431 = vmatpush1.bf16.msra.mxu0 0
        %432 = vmatprep.subr.bf16.mxu0 0
        %433 = vmatpush1.bf16.msra.mxu0 0
        %434 = vmatprep.subr.bf16.mxu0 0
        %435 = vmatpush1.bf16.msra.mxu0 0
        %436 = vmatprep.subr.bf16.mxu0 0
        %437 = vmatpush1.bf16.msra.mxu0 0
        %438 = vmatprep.subr.bf16.mxu0 0
        %439 = vmatpush1.bf16.msra.mxu0 0
        %440 = vmatprep.subr.bf16.mxu0 0
        %441 = vmatpush1.bf16.msra.mxu0 0
        %442 = vmatprep.subr.bf16.mxu0 0
        %443 = vmatpush1.bf16.msra.mxu0 0
        %444 = vmatprep.subr.bf16.mxu0 0
        %445 = vmatpush1.bf16.msra.mxu0 0
        %446 = vmatprep.subr.bf16.mxu0 0
        %447 = vmatpush1.bf16.msra.mxu0 0
        %448 = vmatprep.subr.bf16.mxu0 0
        %449 = vmatpush1.bf16.msra.mxu0 0
        %450 = vmatprep.subr.bf16.mxu0 0
        %451 = vmatpush1.bf16.msra.mxu0 0
        %452 = vmatprep.mubr.bf16.mxu0 0
        %453 = vmatmul.mubr.bf16.gmra.mrb[0].mxu0 %v377
        %v454 = vpop.f32.mrb[0].mxu0
        %v455 = vadd.f32 %v309, %v454
        %v456 = vpop.f32.mrb[0].mxu0
        %v457 = vadd.f32 %v313, %v456
        %v458 = vpop.f32.mrb[0].mxu0
        %v459 = vpop.f32.mrb[0].mxu0
        %460 = vdwg.mxu0
        %461 = vmatprep.subr.bf16.mxu0 0
        %462 = vmatpush1.bf16.msra.mxu0 %v359
        %463 = vmatprep.subr.bf16.mxu0 0
        %464 = vmatpush1.bf16.msra.mxu0 %v364
        %465 = vmatprep.subr.bf16.mxu0 0
        %466 = vmatpush1.bf16.msra.mxu0 0
        %467 = vmatprep.subr.bf16.mxu0 0
        %468 = vmatpush1.bf16.msra.mxu0 0
        %469 = vmatprep.subr.bf16.mxu0 0
        %470 = vmatpush1.bf16.msra.mxu0 0
        %471 = vmatprep.subr.bf16.mxu0 0
        %472 = vmatpush1.bf16.msra.mxu0 0
        %473 = vmatprep.subr.bf16.mxu0 0
        %474 = vmatpush1.bf16.msra.mxu0 0
        %475 = vmatprep.subr.bf16.mxu0 0
        %476 = vmatpush1.bf16.msra.mxu0 0
        %477 = vmatprep.subr.bf16.mxu0 0
        %478 = vmatpush1.bf16.msra.mxu0 0
        %479 = vmatprep.subr.bf16.mxu0 0
        %480 = vmatpush1.bf16.msra.mxu0 0
        %481 = vmatprep.subr.bf16.mxu0 0
        %482 = vmatpush1.bf16.msra.mxu0 0
        %483 = vmatprep.subr.bf16.mxu0 0
        %484 = vmatpush1.bf16.msra.mxu0 0
        %485 = vmatprep.subr.bf16.mxu0 0
        %486 = vmatpush1.bf16.msra.mxu0 0
        %487 = vmatprep.subr.bf16.mxu0 0
        %488 = vmatpush1.bf16.msra.mxu0 0
        %489 = vmatprep.subr.bf16.mxu0 0
        %490 = vmatpush1.bf16.msra.mxu0 0
        %491 = vmatprep.subr.bf16.mxu0 0
        %492 = vmatpush1.bf16.msra.mxu0 0
        %493 = vmatprep.mubr.bf16.mxu0 0
        %494 = vmatmul.mubr.bf16.gmra.mrb[0].mxu0 %v377
        %v495 = vpop.f32.mrb[0].mxu0
        %v496 = vadd.f32 %v317, %v495
        %v497 = vpop.f32.mrb[0].mxu0
        %v498 = vpop.f32.mrb[0].mxu0
        %v499 = vpop.f32.mrb[0].mxu0
        %500 = vdwg.mxu0
        %v501 = vand.u32 2147483647, %v414
        %v502 = vand.u32 2147483647, %v416
        %v503 = vand.u32 2147483647, %v457
        %v504 = vmax.f32 %v496, 0.0
        %v505 = vld [vmem:[%s272] sm:$0xff]
        %507 = vset.pattern.permute.xlu0 0
        %508 = vperm.xlu0 %507, %v505
        %v509 = vpop.permute.xlu0 %508
        %v511 = vmul.f32 %v501, %v509
        %512 = vset.pattern.permute.xlu0 1
        %513 = vperm.xlu0 %512, %v505
        %v514 = vpop.permute.xlu0 %513
        %v516 = vmul.f32 %v501, %v514
        %518 = vrot.lane.b32.xlu0 %v516, 96
        %v519 = vpop.permute.xlu0 %518
        %v521 = vadd.f32 %v511, %v519
        %522 = vset.pattern.permute.xlu0 2
        %523 = vperm.xlu0 %522, %v505
        %v524 = vpop.permute.xlu0 %523
        %v526 = vmul.f32 %v501, %v524
        %528 = vrot.lane.b32.xlu0 %v526, 64
        %v529 = vpop.permute.xlu0 %528
        %v531 = vadd.f32 %v521, %v529
        %532 = vset.pattern.permute.xlu0 3
        %533 = vperm.xlu0 %532, %v505
        %v534 = vpop.permute.xlu0 %533
        %v536 = vmul.f32 %v501, %v534
        %538 = vrot.lane.b32.xlu0 %v536, 32
        %v539 = vpop.permute.xlu0 %538
        %v541 = vadd.f32 %v531, %v539
        %542 = vset.pattern.permute.xlu0 4
        %543 = vperm.xlu0 %542, %v505
        %v544 = vpop.permute.xlu0 %543
        %v546 = vmul.f32 %v502, %v544
        %v547 = vadd.f32 %v541, %v546
        %548 = vset.pattern.permute.xlu0 5
        %549 = vperm.xlu0 %548, %v505
        %v550 = vpop.permute.xlu0 %549
        %v552 = vmul.f32 %v502, %v550
        %554 = vrot.lane.b32.xlu0 %v552, 96
        %v555 = vpop.permute.xlu0 %554
        %v557 = vadd.f32 %v547, %v555
        %558 = vset.pattern.permute.xlu0 6
        %559 = vperm.xlu0 %558, %v505
        %v560 = vpop.permute.xlu0 %559
        %v562 = vmul.f32 %v502, %v560
        %564 = vrot.lane.b32.xlu0 %v562, 64
        %v565 = vpop.permute.xlu0 %564
        %v567 = vadd.f32 %v557, %v565
        %568 = vset.pattern.permute.xlu0 7
        %569 = vperm.xlu0 %568, %v505
        %v570 = vpop.permute.xlu0 %569
        %v572 = vmul.f32 %v502, %v570
        %574 = vrot.lane.b32.xlu0 %v572, 32
        %v575 = vpop.permute.xlu0 %574
        %v577 = vadd.f32 %v567, %v575
        %v578 = vadd.f32 %v577, %v455
        %vm579 = vcmp.gt.f32.partialorder %v578, 0.0
        %v580 = vmin.f32 %v578, 0.0
        %v581 = vmul.f32 %v580, 1.442695
        %v582 = vpow.pop %v581
        %v583 = vsub.f32 %v582, 1.0
        %v584 = vsel %vm579, %v578, %v583
        %v585 = vmul.f32 %v503, %v584
        %v586 = vld [vmem:[%s4] sm:$0x1]
        %v588 = vlaneseq
        %v589 = vshrl.u32 %v588, 7
        %v590 = vsub.s32 0, %v589
        %v591 = vrot.slane %v586, %v590
        %v593 = vmul.f32 %v504, %v591
        %v594 = vadd.f32 %v585, %v593
        %v595 = vsel %vm375, %v594, 0.0
        %596 = vadd.xlane.f32.xlu0 %v595
        %v597 = vpop.xlane.xlu0 %596
        %v598 = vld [vmem:[#allocation2] sm:$0x1]
        %v600 = vlaneseq
        %v601 = vshrl.u32 %v600, 7
        %v602 = vsub.s32 0, %v601
        %v603 = vrot.slane %v598, %v602
        %v605 = vadd.f32 %v597, %v603
        %vm606 = vcmask 7168
        %607 = vst.msk [vmem:[%s280] sm:$0xff] %vm606, %v605
        %p608 = scmp.lt.s32.totalorder %s20, 1
        %s609 = scalar_select %p608, %s20, 1
        %s610 = smul.addr %s609, 8
        %s611 = scalar_lea.vmem %s6, %s610
        // Predicated region
        $region49: #{tpu_custom_call.1} parent=43 // pred_check
          %p612 = pneg %p174
        $region50: #{tpu_custom_call.1} parent=43 // pred_check_branch
          %614 = sbr.rel (%p612) target = $region52
        $region51: #{tpu_custom_call.1} parent=43 // pred_region
          _
        $region52: #{tpu_custom_call.1} parent=43 // pred_fallthru
          _
      $region44: #{tpu_custom_call.1} parent=5 // pred_fallthru
        _
      %p615 = scmp.le.s32.totalorder 2, %s15
      // Predicated region
      $region53: #{tpu_custom_call.1} parent=5 // pred_check
        %p616 = pneg %p615
      $region54: #{tpu_custom_call.1} parent=5 // pred_check_branch
        %618 = sbr.rel (%p616) target = $region56
      $region55: #{tpu_custom_call.1} parent=5 // pred_region
        %s619 = ssub.s32 %s15, 2
        // Predicated region
        $region57: #{tpu_custom_call.1} parent=55 // pred_check
          %p620 = pneg %p180
        $region58: #{tpu_custom_call.1} parent=55 // pred_check_branch
          %622 = sbr.rel (%p620) target = $region60
        $region59: #{tpu_custom_call.1} parent=55 // pred_region
          %p623 = scmp.lt.s32.totalorder %s21, 1
          %s624 = scalar_select %p623, %s21, 1
          %s625 = smul.addr %s624, 8
          %s626 = scalar_lea.vmem %s6, %s625
        $region60: #{tpu_custom_call.1} parent=55 // pred_fallthru
          _
      $region56: #{tpu_custom_call.1} parent=5 // pred_fallthru
        _
    $region6: #{tpu_custom_call.1} parent=1 // loop_footer
      %s19 = sadd.s32 1, %s15
    $region7: #{tpu_custom_call.1} parent=1 // loop_footer_branch
      %14 = sbr.rel target = $region3
    $region8: #{tpu_custom_call.1} parent=1 // loop_exit
      _
    %627 = vsyncpa [#allocation4], 1
    %s628 = scalar_lea.sflag [#allocation4], 1
    %629 = vsyncpa %s628, 1

</llo_original>
